<compile_context>
chip_gen: v6e
topology: v6e:2x2x1
jax: 0.10.0
libtpu: 0.0.40
codegen_flags: <defaults>
</compile_context>

<pallas_src>
import jax
import jax.numpy as jnp
from jax.experimental import pallas as pl
from jax.experimental.pallas import tpu as pltpu

LN_EPS = 1e-5
INV_SQRT2 = 0.7071067811865476


def _round_up(n, m):
    return ((n + m - 1) // m) * m


def _vmem_limit_bytes():
    # Generation-aware VMEM budget: 3/4 of physical per-core VMEM, capped at
    # 64 MiB.  v7x (64 MiB physical) -> 48 MiB; v5e/v6e (128 MiB) -> 64 MiB.
    try:
        cap = int(pltpu.get_tpu_info().vmem_capacity_bytes)
    except Exception:
        cap = 128 * 1024 * 1024
    return int(min(64 * 1024 * 1024, (cap * 3) // 4))


def _layer_norm(x, gamma, beta):
    mean = jnp.mean(x, axis=-1, keepdims=True)
    var = jnp.mean(jnp.square(x - mean), axis=-1, keepdims=True)
    inv = jax.lax.rsqrt(var + LN_EPS)
    return (x - mean) * inv * gamma + beta


def _gelu(x):
    # exact (erf-based) GELU, matching torch.nn.GELU(approximate='none')
    return 0.5 * x * (1.0 + jax.lax.erf(x * INV_SQRT2))


# ----------------------------------------------------------------------------
# Kernels
# ----------------------------------------------------------------------------
def _mlp_hidden_kernel(x_ref, ln1_g, ln1_b, w1, b1, w2, b2, lnf_g, lnf_b,
                       h_ref):
    """Residual MLP block + final LayerNorm for one batch tile -> bf16 hidden."""
    x = x_ref[...].astype(jnp.float32)

    h = _layer_norm(x, ln1_g[...], ln1_b[...])
    h = jnp.dot(h.astype(jnp.bfloat16), w1[...],
                preferred_element_type=jnp.float32) + b1[...]
    h = _gelu(h)
    h = jnp.dot(h.astype(jnp.bfloat16), w2[...],
                preferred_element_type=jnp.float32) + b2[...]
    x = x + h

    h_ref[...] = _layer_norm(x, lnf_g[...], lnf_b[...]).astype(h_ref.dtype)


def _proj_kernel(h_ref, wp_ref, bp_ref, out_ref):
    """Vocab projection for one (batch tile, vocab tile): (tb,D) @ (D,tv)."""
    logits = jnp.dot(h_ref[...], wp_ref[...],
                     preferred_element_type=jnp.float32) + bp_ref[...]
    out_ref[...] = logits.astype(out_ref.dtype)


# ----------------------------------------------------------------------------
# One-time weight preparation (hoisted out of the per-call wrapper)
# ----------------------------------------------------------------------------
def _pick_vocab_tile(V, tv_target=2048):
    """Choose a lane-dense vocab tile (multiple of 128, <= target) that nearly
    divides V, minimizing wasted MXU/DMA work on padded columns."""
    hi = min(_round_up(V, 128), _round_up(max(tv_target, 128), 128))
    cands = list(range(hi, 127, -128))  # descending
    best_waste = min(_round_up(V, c) - V for c in cands)
    slack = best_waste + max(V // 200, 0)  # allow 0.5% extra waste for bigger tiles
    for c in cands:
        if _round_up(V, c) - V <= slack:
            return c
    return 128


def prepare_params(params, *, tv=2048):
    """Cast matmul weights to bf16 and pad the [D, V] projection ONCE.

    Doing this per forward call would read+write the full projection weight
    from HBM before the kernel even starts; callers should cache the result.
    """
    D, H = params["w1"].shape
    V = params["wp"].shape[1]
    tv = _pick_vocab_tile(V, tv)
    Vp = _round_up(V, tv)

    wp = params["wp"].astype(jnp.bfloat16)
    bp = params["bp"].astype(jnp.float32)
    if Vp != V:
        wp = jnp.pad(wp, ((0, 0), (0, Vp - V)))
        bp = jnp.pad(bp, ((0, 0), (0, Vp - V)))

    return {
        "D": D, "H": H, "V": V, "Vp": Vp, "tv": tv,
        "ln1_g": params["ln1_g"].astype(jnp.float32),
        "ln1_b": params["ln1_b"].astype(jnp.float32),
        "w1": params["w1"].astype(jnp.bfloat16),
        "b1": params["b1"].astype(jnp.float32),
        "w2": params["w2"].astype(jnp.bfloat16),
        "b2": params["b2"].astype(jnp.float32),
        "lnf_g": params["lnf_g"].astype(jnp.float32),
        "lnf_b": params["lnf_b"].astype(jnp.float32),
        "wp": wp,
        "bp": bp,
        # registered buffers (float64 in torch)
        # TODO(synk): torch buffers are float64; kept as float32 for TPU.
        "cap_fq": params["cap_fq"],
        "num_samples": params["num_samples"],
    }


# ----------------------------------------------------------------------------
# Forward wrapper
# ----------------------------------------------------------------------------
def mix_cls_head_pallas(x, p, *, tb=512, out_dtype=jnp.bfloat16):
    """MixClsHead forward: x [B, D] -> logits [B, V] (out_dtype).

    `p` must come from prepare_params().
    """
    B, D = x.shape
    assert D == p["D"], (D, p["D"])
    H, V, Vp, tv = p["H"], p["V"], p["Vp"], p["tv"]

    # Batch tile: as large as the (padded) problem allows, multiple of 8.
    tb = max(8, min(tb, _round_up(B, 8)))
    Bp = _round_up(B, tb)
    if Bp != B:
        x = jnp.pad(x, ((0, Bp - B), (0, 0)))
    nb = Bp // tb
    nv = Vp // tv

    vmem_limit = _vmem_limit_bytes()

    def rep(shape):
        # Grid-invariant block: single buffer (no prefetch needed since the
        # block index never changes).  Halves the w1/w2 VMEM footprint.
        return pl.BlockSpec(shape, lambda i: (0, 0),
                            pipeline_mode=pl.Buffered(1))

    # ---- pass 1: residual MLP + final LN -> hidden h [Bp, D] (bf16) --------
    mlp_cost = pl.CostEstimate(
        flops=4 * Bp * D * H,
        transcendentals=Bp * H,
        bytes_accessed=Bp * D * 4 + 2 * D * H * 2 + Bp * D * 2,
    )
    h = pl.pallas_call(
        _mlp_hidden_kernel,
        out_shape=jax.ShapeDtypeStruct((Bp, D), jnp.bfloat16),
        grid_spec=pltpu.PrefetchScalarGridSpec(
            num_scalar_prefetch=0,
            grid=(nb,),
            in_specs=[
                pl.BlockSpec((tb, D), lambda i: (i, 0)),  # image_embs tile
                rep((1, D)), rep((1, D)),                 # ln1 gamma/beta
                rep((D, H)), rep((1, H)),                 # fc1 W, b
                rep((H, D)), rep((1, D)),                 # fc2 W, b
                rep((1, D)), rep((1, D)),                 # final LN gamma/beta
            ],
            out_specs=pl.BlockSpec((tb, D), lambda i: (i, 0)),
        ),
        compiler_params=pltpu.CompilerParams(
            dimension_semantics=("parallel",),
            vmem_limit_bytes=vmem_limit,
        ),
        cost_estimate=mlp_cost,
    )(x, p["ln1_g"], p["ln1_b"], p["w1"], p["b1"], p["w2"], p["b2"],
      p["lnf_g"], p["lnf_b"])

    # ---- pass 2: vocab projection; each (D, tv) wp tile streamed once ------
    proj_cost = pl.CostEstimate(
        flops=2 * Bp * D * Vp,
        transcendentals=0,
        bytes_accessed=(nv * Bp * D * 2          # h re-read per vocab tile (tiny)
                        + D * Vp * 2             # wp streamed exactly once
                        + Vp * 4                 # proj bias
                        + Bp * Vp * int(jnp.dtype(out_dtype).itemsize)),
    )
    out = pl.pallas_call(
        _proj_kernel,
        out_shape=jax.ShapeDtypeStruct((Bp, Vp), out_dtype),
        grid_spec=pltpu.PrefetchScalarGridSpec(
            num_scalar_prefetch=0,
            grid=(nv, nb),  # vocab outer -> wp block index changes only on j
            in_specs=[
                pl.BlockSpec((tb, D), lambda j, i: (i, 0)),  # hidden tile
                pl.BlockSpec((D, tv), lambda j, i: (0, j)),  # proj W vocab tile
                pl.BlockSpec((1, tv), lambda j, i: (0, j)),  # proj b vocab tile
            ],
            out_specs=pl.BlockSpec((tb, tv), lambda j, i: (i, j)),
        ),
        compiler_params=pltpu.CompilerParams(
            # Vocab tiles are fully independent -> v7x shards the projection
            # weight across its two TensorCores; batch is the sequential axis.
            dimension_semantics=("parallel", "arbitrary"),
            vmem_limit_bytes=vmem_limit,
        ),
        cost_estimate=proj_cost,
    )(h, p["wp"], p["bp"])

    return out[:B, :V]


def mix_cls_head_ref(x, p):
    """Pure-JAX f32 reference of the same head (for correctness checking)."""
    x = x.astype(jnp.float32)
    h = _layer_norm(x, p["ln1_g"], p["ln1_b"])
    h = _gelu(h @ p["w1"] + p["b1"]) @ p["w2"] + p["b2"]
    x = x + h
    h = _layer_norm(x, p["lnf_g"], p["lnf_b"])
    return h @ p["wp"] + p["bp"]


def classifier_forward(prepared_params, image, text, image_embs=None):
    """Mirrors Classifier.forward (precomputed image_embs path)."""
    if image_embs is None:
        # TODO(synk): full _build_vision_tower ViT (visual) not implemented;
        # this script exercises the precomputed image_embs path of forward().
        raise NotImplementedError("provide image_embs")
    logits = mix_cls_head_pallas(image_embs, prepared_params)
    labels = jnp.asarray(text)  # text.clone()
    return {
        "cap_fq": prepared_params["cap_fq"],
        "num_samples": prepared_params["num_samples"],
        "logits": logits,
        "labels": labels,
        "logit_scale": jnp.ones([1], jnp.float32),
    }


def init_params(key, embed_dim, vocab_size, mlp_ratio=4):
    D, V, H = embed_dim, vocab_size, embed_dim * mlp_ratio
    k1, k2, k3 = jax.random.split(key, 3)
    scale = 0.02
    return {
        "ln1_g": jnp.ones((1, D), jnp.float32),
        "ln1_b": jnp.zeros((1, D), jnp.float32),
        "w1": scale * jax.random.normal(k1, (D, H), jnp.float32),
        "b1": jnp.zeros((1, H), jnp.float32),
        "w2": scale * jax.random.normal(k2, (H, D), jnp.float32),
        "b2": jnp.zeros((1, D), jnp.float32),
        "lnf_g": jnp.ones((1, D), jnp.float32),
        "lnf_b": jnp.zeros((1, D), jnp.float32),
        "wp": scale * jax.random.normal(k3, (D, V), jnp.float32),
        "bp": jnp.zeros((1, V), jnp.float32),
        # registered buffers (float64 in torch) kept as float32 for TPU.
        "cap_fq": jnp.zeros((1, V), jnp.float32),
        "num_samples": jnp.zeros((1, 1), jnp.float32),
    }


if __name__ == "__main__":
    # Small shapes, chosen so padding + multi-tile paths are still exercised.
    B, D, V, SEQ = 12, 32, 320, 8  # batch, embed_dim, vocab_size, text seq len

    key = jax.random.PRNGKey(0)
    k_params, k_embs, k_text = jax.random.split(key, 3)

    params = init_params(k_params, embed_dim=D, vocab_size=V)
    image_embs = jax.random.normal(k_embs, (B, D), jnp.float32)
    text = jax.random.randint(k_text, (B, SEQ), 0, V, dtype=jnp.int32)

    ref = mix_cls_head_ref(image_embs, params)

    # One-time weight preparation (bf16 casts + vocab padding), then forward.
    prepped = prepare_params(params)
    out = classifier_forward(prepped, image=None, text=text,
                             image_embs=image_embs)
    logits = jax.block_until_ready(out["logits"]).astype(jnp.float32)

    assert logits.shape == (B, V)
    assert out["labels"].shape == (B, SEQ)
    # bf16 matmuls (f32 accumulation) + bf16 logits -> loose tolerance.
    assert jnp.allclose(logits, ref, atol=5e-2, rtol=5e-2), float(
        jnp.max(jnp.abs(logits - ref)))

    # Explicitly exercise the multi-tile (nv, nb) grid: tv=128 (3 vocab tiles),
    # tb=8 (2 batch tiles), f32 output path.
    prepped_small = prepare_params(params, tv=128)
    logits_tiled = jax.block_until_ready(
        mix_cls_head_pallas(image_embs, prepped_small, tb=8,
                            out_dtype=jnp.float32))
    assert logits_tiled.shape == (B, V)
    assert jnp.allclose(logits_tiled, ref, atol=5e-2, rtol=5e-2), float(
        jnp.max(jnp.abs(logits_tiled - ref)))

    print("KERNEL_OK")
</pallas_src>

<mosaic_0001>
module attributes {stable_mosaic.version = 11 : i64} {
  func.func @_mlp_hidden_kernel(%arg0: i32, %arg1: memref<16x32xf32, #tpu.memory_space<vmem>>, %arg2: memref<1x32xf32, #tpu.memory_space<vmem>>, %arg3: memref<1x32xf32, #tpu.memory_space<vmem>>, %arg4: memref<32x128xbf16, #tpu.memory_space<vmem>>, %arg5: memref<1x128xf32, #tpu.memory_space<vmem>>, %arg6: memref<128x32xbf16, #tpu.memory_space<vmem>>, %arg7: memref<1x32xf32, #tpu.memory_space<vmem>>, %arg8: memref<1x32xf32, #tpu.memory_space<vmem>>, %arg9: memref<1x32xf32, #tpu.memory_space<vmem>>, %arg10: memref<16x32xbf16, #tpu.memory_space<vmem>>) attributes {dimension_semantics = [#tpu.dimension_semantics<parallel>], iteration_bounds = array<i64: 1>, scalar_prefetch = 0 : i64, scratch_operands = 0 : i64, tpu.core_type = #tpu.core_type<tc>, window_params = [{transform_indices = @transform_0, window_bounds = array<i64: 16, 32>}, {pipeline_mode = #tpu.pipeline_mode<synchronous>, transform_indices = @transform_1, window_bounds = array<i64: 1, 32>}, {pipeline_mode = #tpu.pipeline_mode<synchronous>, transform_indices = @transform_2, window_bounds = array<i64: 1, 32>}, {pipeline_mode = #tpu.pipeline_mode<synchronous>, transform_indices = @transform_3, window_bounds = array<i64: 32, 128>}, {pipeline_mode = #tpu.pipeline_mode<synchronous>, transform_indices = @transform_4, window_bounds = array<i64: 1, 128>}, {pipeline_mode = #tpu.pipeline_mode<synchronous>, transform_indices = @transform_5, window_bounds = array<i64: 128, 32>}, {pipeline_mode = #tpu.pipeline_mode<synchronous>, transform_indices = @transform_6, window_bounds = array<i64: 1, 32>}, {pipeline_mode = #tpu.pipeline_mode<synchronous>, transform_indices = @transform_7, window_bounds = array<i64: 1, 32>}, {pipeline_mode = #tpu.pipeline_mode<synchronous>, transform_indices = @transform_8, window_bounds = array<i64: 1, 32>}, {transform_indices = @transform_9, window_bounds = array<i64: 16, 32>}]} {
    %c0 = arith.constant 0 : index
    %c0_0 = arith.constant 0 : index
    %0 = vector.load %arg1[%c0, %c0_0] : memref<16x32xf32, #tpu.memory_space<vmem>>, vector<16x32xf32>
    %c0_1 = arith.constant 0 : index
    %c0_2 = arith.constant 0 : index
    %1 = vector.load %arg2[%c0_1, %c0_2] : memref<1x32xf32, #tpu.memory_space<vmem>>, vector<1x32xf32>
    %c0_3 = arith.constant 0 : index
    %c0_4 = arith.constant 0 : index
    %2 = vector.load %arg3[%c0_3, %c0_4] : memref<1x32xf32, #tpu.memory_space<vmem>>, vector<1x32xf32>
    %cst = arith.constant dense<0.000000e+00> : vector<16xf32>
    %3 = vector.multi_reduction <add>, %0, %cst [1] : vector<16x32xf32> to vector<16xf32>
    %4 = vector.shape_cast %3 : vector<16xf32> to vector<16x1xf32>
    %cst_5 = arith.constant 3.200000e+01 : f32
    %5 = vector.broadcast %cst_5 : f32 to vector<16x1xf32>
    %6 = arith.divf %4, %5 : vector<16x1xf32>
    %7 = vector.broadcast %6 : vector<16x1xf32> to vector<16x32xf32>
    %8 = arith.subf %0, %7 : vector<16x32xf32>
    %9 = arith.mulf %8, %8 : vector<16x32xf32>
    %cst_6 = arith.constant dense<0.000000e+00> : vector<16xf32>
    %10 = vector.multi_reduction <add>, %9, %cst_6 [1] : vector<16x32xf32> to vector<16xf32>
    %11 = vector.shape_cast %10 : vector<16xf32> to vector<16x1xf32>
    %cst_7 = arith.constant 3.200000e+01 : f32
    %12 = vector.broadcast %cst_7 : f32 to vector<16x1xf32>
    %13 = arith.divf %11, %12 : vector<16x1xf32>
    %cst_8 = arith.constant 9.99999974E-6 : f32
    %14 = vector.broadcast %cst_8 : f32 to vector<16x1xf32>
    %15 = arith.addf %13, %14 : vector<16x1xf32>
    %16 = math.rsqrt %15 : vector<16x1xf32>
    %17 = vector.broadcast %6 : vector<16x1xf32> to vector<16x32xf32>
    %18 = arith.subf %0, %17 : vector<16x32xf32>
    %19 = vector.broadcast %16 : vector<16x1xf32> to vector<16x32xf32>
    %20 = arith.mulf %18, %19 : vector<16x32xf32>
    %21 = vector.broadcast %1 : vector<1x32xf32> to vector<16x32xf32>
    %22 = arith.mulf %20, %21 : vector<16x32xf32>
    %23 = vector.broadcast %2 : vector<1x32xf32> to vector<16x32xf32>
    %24 = arith.addf %22, %23 : vector<16x32xf32>
    %25 = arith.truncf %24 : vector<16x32xf32> to vector<16x32xbf16>
    %c0_9 = arith.constant 0 : index
    %c0_10 = arith.constant 0 : index
    %26 = vector.load %arg4[%c0_9, %c0_10] : memref<32x128xbf16, #tpu.memory_space<vmem>>, vector<32x128xbf16>
    %cst_11 = arith.constant dense<0.000000e+00> : vector<16x128xf32>
    %27 = tpu.matmul %25, %26, %cst_11 {dimension_numbers = #tpu.dot_dimension_numbers<[1], [0], [0], [1], [0, 0, 1, 1], [], []>} : vector<16x32xbf16>, vector<32x128xbf16>, vector<16x128xf32> -> vector<16x128xf32>
    %c0_12 = arith.constant 0 : index
    %c0_13 = arith.constant 0 : index
    %28 = vector.load %arg5[%c0_12, %c0_13] : memref<1x128xf32, #tpu.memory_space<vmem>>, vector<1x128xf32>
    %29 = vector.broadcast %28 : vector<1x128xf32> to vector<16x128xf32>
    %30 = arith.addf %27, %29 : vector<16x128xf32>
    %cst_14 = arith.constant 5.000000e-01 : f32
    %31 = vector.broadcast %cst_14 : f32 to vector<16x128xf32>
    %32 = arith.mulf %31, %30 : vector<16x128xf32>
    %cst_15 = arith.constant 0.707106769 : f32
    %33 = vector.broadcast %cst_15 : f32 to vector<16x128xf32>
    %34 = arith.mulf %30, %33 : vector<16x128xf32>
    %35 = math.erf %34 : vector<16x128xf32>
    %cst_16 = arith.constant 1.000000e+00 : f32
    %36 = vector.broadcast %cst_16 : f32 to vector<16x128xf32>
    %37 = arith.addf %36, %35 : vector<16x128xf32>
    %38 = arith.mulf %32, %37 : vector<16x128xf32>
    %39 = arith.truncf %38 : vector<16x128xf32> to vector<16x128xbf16>
    %c0_17 = arith.constant 0 : index
    %c0_18 = arith.constant 0 : index
    %40 = vector.load %arg6[%c0_17, %c0_18] : memref<128x32xbf16, #tpu.memory_space<vmem>>, vector<128x32xbf16>
    %cst_19 = arith.constant dense<0.000000e+00> : vector<16x32xf32>
    %41 = tpu.matmul %39, %40, %cst_19 {dimension_numbers = #tpu.dot_dimension_numbers<[1], [0], [0], [1], [0, 0, 1, 1], [], []>} : vector<16x128xbf16>, vector<128x32xbf16>, vector<16x32xf32> -> vector<16x32xf32>
    %c0_20 = arith.constant 0 : index
    %c0_21 = arith.constant 0 : index
    %42 = vector.load %arg7[%c0_20, %c0_21] : memref<1x32xf32, #tpu.memory_space<vmem>>, vector<1x32xf32>
    %43 = vector.broadcast %42 : vector<1x32xf32> to vector<16x32xf32>
    %44 = arith.addf %41, %43 : vector<16x32xf32>
    %45 = arith.addf %0, %44 : vector<16x32xf32>
    %c0_22 = arith.constant 0 : index
    %c0_23 = arith.constant 0 : index
    %46 = vector.load %arg8[%c0_22, %c0_23] : memref<1x32xf32, #tpu.memory_space<vmem>>, vector<1x32xf32>
    %c0_24 = arith.constant 0 : index
    %c0_25 = arith.constant 0 : index
    %47 = vector.load %arg9[%c0_24, %c0_25] : memref<1x32xf32, #tpu.memory_space<vmem>>, vector<1x32xf32>
    %cst_26 = arith.constant dense<0.000000e+00> : vector<16xf32>
    %48 = vector.multi_reduction <add>, %45, %cst_26 [1] : vector<16x32xf32> to vector<16xf32>
    %49 = vector.shape_cast %48 : vector<16xf32> to vector<16x1xf32>
    %cst_27 = arith.constant 3.200000e+01 : f32
    %50 = vector.broadcast %cst_27 : f32 to vector<16x1xf32>
    %51 = arith.divf %49, %50 : vector<16x1xf32>
    %52 = vector.broadcast %51 : vector<16x1xf32> to vector<16x32xf32>
    %53 = arith.subf %45, %52 : vector<16x32xf32>
    %54 = arith.mulf %53, %53 : vector<16x32xf32>
    %cst_28 = arith.constant dense<0.000000e+00> : vector<16xf32>
    %55 = vector.multi_reduction <add>, %54, %cst_28 [1] : vector<16x32xf32> to vector<16xf32>
    %56 = vector.shape_cast %55 : vector<16xf32> to vector<16x1xf32>
    %cst_29 = arith.constant 3.200000e+01 : f32
    %57 = vector.broadcast %cst_29 : f32 to vector<16x1xf32>
    %58 = arith.divf %56, %57 : vector<16x1xf32>
    %cst_30 = arith.constant 9.99999974E-6 : f32
    %59 = vector.broadcast %cst_30 : f32 to vector<16x1xf32>
    %60 = arith.addf %58, %59 : vector<16x1xf32>
    %61 = math.rsqrt %60 : vector<16x1xf32>
    %62 = vector.broadcast %51 : vector<16x1xf32> to vector<16x32xf32>
    %63 = arith.subf %45, %62 : vector<16x32xf32>
    %64 = vector.broadcast %61 : vector<16x1xf32> to vector<16x32xf32>
    %65 = arith.mulf %63, %64 : vector<16x32xf32>
    %66 = vector.broadcast %46 : vector<1x32xf32> to vector<16x32xf32>
    %67 = arith.mulf %65, %66 : vector<16x32xf32>
    %68 = vector.broadcast %47 : vector<1x32xf32> to vector<16x32xf32>
    %69 = arith.addf %67, %68 : vector<16x32xf32>
    %70 = arith.truncf %69 : vector<16x32xf32> to vector<16x32xbf16>
    %c0_31 = arith.constant 0 : index
    %c0_32 = arith.constant 0 : index
    %71 = vector.load %arg10[%c0_31, %c0_32] : memref<16x32xbf16, #tpu.memory_space<vmem>>, vector<16x32xbf16>
    tpu.vector_store %arg10[%c0_31, %c0_32], %70 {strides = array<i32>} : memref<16x32xbf16, #tpu.memory_space<vmem>>, vector<16x32xbf16>,
    return
  }
  func.func @transform_0(%arg0: i32) -> (i32, i32) {
    %c0_i32 = arith.constant 0 : i32
    %c0_i32_0 = arith.constant 0 : i32
    return %arg0, %c0_i32 : i32, i32
  }
  func.func @transform_1(%arg0: i32) -> (i32, i32) {
    %c0_i32 = arith.constant 0 : i32
    %c0_i32_0 = arith.constant 0 : i32
    %c0_i32_1 = arith.constant 0 : i32
    return %c0_i32, %c0_i32_0 : i32, i32
  }
  func.func @transform_2(%arg0: i32) -> (i32, i32) {
    %c0_i32 = arith.constant 0 : i32
    %c0_i32_0 = arith.constant 0 : i32
    %c0_i32_1 = arith.constant 0 : i32
    return %c0_i32, %c0_i32_0 : i32, i32
  }
  func.func @transform_3(%arg0: i32) -> (i32, i32) {
    %c0_i32 = arith.constant 0 : i32
    %c0_i32_0 = arith.constant 0 : i32
    %c0_i32_1 = arith.constant 0 : i32
    return %c0_i32, %c0_i32_0 : i32, i32
  }
  func.func @transform_4(%arg0: i32) -> (i32, i32) {
    %c0_i32 = arith.constant 0 : i32
    %c0_i32_0 = arith.constant 0 : i32
    %c0_i32_1 = arith.constant 0 : i32
    return %c0_i32, %c0_i32_0 : i32, i32
  }
  func.func @transform_5(%arg0: i32) -> (i32, i32) {
    %c0_i32 = arith.constant 0 : i32
    %c0_i32_0 = arith.constant 0 : i32
    %c0_i32_1 = arith.constant 0 : i32
    return %c0_i32, %c0_i32_0 : i32, i32
  }
  func.func @transform_6(%arg0: i32) -> (i32, i32) {
    %c0_i32 = arith.constant 0 : i32
    %c0_i32_0 = arith.constant 0 : i32
    %c0_i32_1 = arith.constant 0 : i32
    return %c0_i32, %c0_i32_0 : i32, i32
  }
  func.func @transform_7(%arg0: i32) -> (i32, i32) {
    %c0_i32 = arith.constant 0 : i32
    %c0_i32_0 = arith.constant 0 : i32
    %c0_i32_1 = arith.constant 0 : i32
    return %c0_i32, %c0_i32_0 : i32, i32
  }
  func.func @transform_8(%arg0: i32) -> (i32, i32) {
    %c0_i32 = arith.constant 0 : i32
    %c0_i32_0 = arith.constant 0 : i32
    %c0_i32_1 = arith.constant 0 : i32
    return %c0_i32, %c0_i32_0 : i32, i32
  }
  func.func @transform_9(%arg0: i32) -> (i32, i32) {
    %c0_i32 = arith.constant 0 : i32
    %c0_i32_0 = arith.constant 0 : i32
    return %arg0, %c0_i32 : i32, i32
  }
}

</mosaic_0001>

<llo_original>
// kernel: tpu_custom_call.1
$region0: #{tpu_custom_call.1}
  #allocation0 [shape = 'u32[]', space=smem, size = 0x4, offset = 0x4, fixed_abs, tag = 'smem constant byte address 0x4 - core index']
  #allocation1 [shape = 'u32[144,128]{1,0:T(1,128)}', space=vmem, size = 0x12000, scoped, tag = 'internal scratch']
  %s0 = inlined_call_operand.vmem [shape: f32[16,32], index: 0, kind: input, shape index: {}]
  %s1 = inlined_call_operand.vmem [shape: f32[1,32], index: 1, kind: input, shape index: {}]
  %s2 = inlined_call_operand.vmem [shape: f32[1,32], index: 2, kind: input, shape index: {}]
  %s3 = inlined_call_operand.vmem [shape: bf16[32,128], index: 3, kind: input, shape index: {}]
  %s4 = inlined_call_operand.vmem [shape: f32[1,128], index: 4, kind: input, shape index: {}]
  %s5 = inlined_call_operand.vmem [shape: bf16[128,32], index: 5, kind: input, shape index: {}]
  %s6 = inlined_call_operand.vmem [shape: f32[1,32], index: 6, kind: input, shape index: {}]
  %s7 = inlined_call_operand.vmem [shape: f32[1,32], index: 7, kind: input, shape index: {}]
  %s8 = inlined_call_operand.vmem [shape: f32[1,32], index: 8, kind: input, shape index: {}]
  %s9 = inlined_call_operand.hbm [shape: bf16[16,32], index: 9, kind: output, shape index: {}]
  %s10 = sld [smem:[#allocation0]]
  $region46: #{tpu_custom_call.1} parent=0
    _
  %s12 = ssub.s32 1, %s10
  %s13 = scalar_select 0, %s12, %s10
  $region1: #{tpu_custom_call.1} parent=0
    #allocation2 [shape = 'u8[4096]{0}', space=vmem, size = 0x1000, scoped, tag = 'output window, operand 0, single buffered']
    #allocation3 [shape = 's32[1]{0}', space=sflag, size = 0x4, scoped, tag = 'scoped memory for tpu_custom_call.1']
    %14 = vsyncpa [#allocation3], 0
    // Predicated region
    $region2: #{tpu_custom_call.1} parent=1 // pred_check
      _
    $region3: #{tpu_custom_call.1} parent=1 // pred_check_branch
      %16 = sbr.rel (0) target = $region5
    $region4: #{tpu_custom_call.1} parent=1 // pred_region
      _
    $region5: #{tpu_custom_call.1} parent=1 // pred_fallthru
      _
    // Predicated region
    $region6: #{tpu_custom_call.1} parent=1 // pred_check
      _
    $region7: #{tpu_custom_call.1} parent=1 // pred_check_branch
      %18 = sbr.rel (0) target = $region9
    $region8: #{tpu_custom_call.1} parent=1 // pred_region
      _
    $region9: #{tpu_custom_call.1} parent=1 // pred_fallthru
      _
    // Predicated region
    $region10: #{tpu_custom_call.1} parent=1 // pred_check
      _
    $region11: #{tpu_custom_call.1} parent=1 // pred_check_branch
      %20 = sbr.rel (0) target = $region13
    $region12: #{tpu_custom_call.1} parent=1 // pred_region
      _
    $region13: #{tpu_custom_call.1} parent=1 // pred_fallthru
      _
    // Predicated region
    $region14: #{tpu_custom_call.1} parent=1 // pred_check
      _
    $region15: #{tpu_custom_call.1} parent=1 // pred_check_branch
      %22 = sbr.rel (0) target = $region17
    $region16: #{tpu_custom_call.1} parent=1 // pred_region
      _
    $region17: #{tpu_custom_call.1} parent=1 // pred_fallthru
      _
    // Predicated region
    $region18: #{tpu_custom_call.1} parent=1 // pred_check
      _
    $region19: #{tpu_custom_call.1} parent=1 // pred_check_branch
      %24 = sbr.rel (0) target = $region21
    $region20: #{tpu_custom_call.1} parent=1 // pred_region
      _
    $region21: #{tpu_custom_call.1} parent=1 // pred_fallthru
      _
    // Predicated region
    $region22: #{tpu_custom_call.1} parent=1 // pred_check
      _
    $region23: #{tpu_custom_call.1} parent=1 // pred_check_branch
      %26 = sbr.rel (0) target = $region25
    $region24: #{tpu_custom_call.1} parent=1 // pred_region
      _
    $region25: #{tpu_custom_call.1} parent=1 // pred_fallthru
      _
    // Predicated region
    $region26: #{tpu_custom_call.1} parent=1 // pred_check
      _
    $region27: #{tpu_custom_call.1} parent=1 // pred_check_branch
      %28 = sbr.rel (0) target = $region29
    $region28: #{tpu_custom_call.1} parent=1 // pred_region
      _
    $region29: #{tpu_custom_call.1} parent=1 // pred_fallthru
      _
    // Predicated region
    $region30: #{tpu_custom_call.1} parent=1 // pred_check
      _
    $region31: #{tpu_custom_call.1} parent=1 // pred_check_branch
      %30 = sbr.rel (0) target = $region33
    $region32: #{tpu_custom_call.1} parent=1 // pred_region
      _
    $region33: #{tpu_custom_call.1} parent=1 // pred_fallthru
      _
    // Predicated region
    $region34: #{tpu_custom_call.1} parent=1 // pred_check
      _
    $region35: #{tpu_custom_call.1} parent=1 // pred_check_branch
      %32 = sbr.rel (0) target = $region37
    $region36: #{tpu_custom_call.1} parent=1 // pred_region
      _
    $region37: #{tpu_custom_call.1} parent=1 // pred_fallthru
      _
    %v34 = vld [vmem:[%s0] sm:$0xff]
    %v35 = vld [vmem:[%s0 + $0x8] sm:$0xff]
    %v36 = vld [vmem:[%s1] sm:$0x1]
    %v37 = vld [vmem:[%s2] sm:$0x1]
    %vm38 = vcmask 261120
    %v39 = vsel %vm38, %v34, 0.0
    %40 = vadd.xlane.f32.xlu0 %v39
    %v41 = vpop.xlane.xlu0 %40
    %v42 = vsel %vm38, %v35, 0.0
    %43 = vadd.xlane.f32.xlu0 %v42
    %v44 = vpop.xlane.xlu0 %43
    %v45 = vrcp.pop 32.0
    %v46 = vmul.f32 %v41, %v45
    %v47 = vmul.f32 %v44, %v45
    %v48 = vsub.f32 %v34, %v46
    %v49 = vsub.f32 %v35, %v47
    %v50 = vmul.f32 %v48, %v48
    %v51 = vmul.f32 %v49, %v49
    %v52 = vsel %vm38, %v50, 0.0
    %53 = vadd.xlane.f32.xlu0 %v52
    %v54 = vpop.xlane.xlu0 %53
    %v55 = vsel %vm38, %v51, 0.0
    %56 = vadd.xlane.f32.xlu0 %v55
    %v57 = vpop.xlane.xlu0 %56
    %v58 = vmul.f32 %v54, %v45
    %v59 = vmul.f32 %v57, %v45
    %v60 = vadd.f32 %v58, 1e-05
    %v61 = vadd.f32 %v59, 1e-05
    %v62 = vrsqrt.pop %v60
    %v63 = vrsqrt.pop %v61
    %v64 = vmul.f32 %v48, %v62
    %v65 = vmul.f32 %v49, %v63
    %v67 = vlaneseq
    %v68 = vshrl.u32 %v67, 7
    %v69 = vsub.s32 0, %v68
    %v70 = vrot.slane %v36, %v69
    %v72 = vmul.f32 %v64, %v70
    %v73 = vmul.f32 %v65, %v70
    %v75 = vlaneseq
    %v76 = vshrl.u32 %v75, 7
    %v77 = vsub.s32 0, %v76
    %v78 = vrot.slane %v37, %v77
    %v80 = vadd.f32 %v72, %v78
    %v81 = vadd.f32 %v73, %v78
    %v82 = vpack.c.bf16 %v81, %v80
    %v83 = vld [vmem:[%s3] sm:$0xf]
    %v84 = vld [vmem:[%s3 + $0x4] sm:$0xf]
    %v85 = vld [vmem:[%s3 + $0x8] sm:$0xf]
    %v86 = vld [vmem:[%s3 + $0xc] sm:$0xf]
    %v87 = vld [vmem:[%s4] sm:$0x1]
    %v89 = vlaneseq
    %v90 = vshrl.u32 %v89, 7
    %v91 = vsub.s32 0, %v90
    %v92 = vrot.slane %v87, %v91
    %v98 = vunpack.c.l.b16 %v83
    %v99 = vunpack.c.l.b16 %v84
    %v100 = vunpack.c.l.b16 %v85
    %v101 = vunpack.c.l.b16 %v86
    %v102 = vpack.c.b16 %v99, %v98
    %v103 = vpack.c.b16 %v101, %v100
    %v107 = vsel %vm38, %v82, 0
    %109 = vmatprep.subr.bf16.mxu0 0
    %110 = vmatpush1.bf16.msra.mxu0 0
    %111 = vmatprep.subr.bf16.mxu0 0
    %112 = vmatpush1.bf16.msra.mxu0 0
    %113 = vmatprep.subr.bf16.mxu0 0
    %114 = vmatpush1.bf16.msra.mxu0 0
    %115 = vmatprep.subr.bf16.mxu0 0
    %116 = vmatpush1.bf16.msra.mxu0 0
    %117 = vmatprep.subr.bf16.mxu0 0
    %118 = vmatpush1.bf16.msra.mxu0 0
    %119 = vmatprep.subr.bf16.mxu0 0
    %120 = vmatpush1.bf16.msra.mxu0 0
    %121 = vmatprep.subr.bf16.mxu0 0
    %122 = vmatpush1.bf16.msra.mxu0 %v103
    %123 = vmatprep.subr.bf16.mxu0 0
    %124 = vmatpush1.bf16.msra.mxu0 %v102
    %125 = vmatprep.subr.bf16.mxu0 0
    %126 = vmatpush2.bf16.msra.mxu0 0
    %127 = vmatprep.subr.bf16.mxu0 0
    %128 = vmatpush2.bf16.msra.mxu0 0
    %129 = vmatprep.subr.bf16.mxu0 0
    %130 = vmatpush2.bf16.msra.mxu0 0
    %131 = vmatprep.subr.bf16.mxu0 0
    %132 = vmatpush2.bf16.msra.mxu0 0
    %133 = vmatprep.subr.bf16.mxu0 0
    %134 = vmatpush2.bf16.msra.mxu0 0
    %135 = vmatprep.subr.bf16.mxu0 0
    %136 = vmatpush2.bf16.msra.mxu0 0
    %137 = vmatprep.subr.bf16.mxu0 0
    %138 = vmatpush2.bf16.msra.mxu0 0
    %139 = vmatprep.subr.bf16.mxu0 0
    %140 = vmatpush2.bf16.msra.mxu0 0
    %141 = vmatprep.mubr.bf16.mxu0 0
    %142 = vmatmul.mubr.bf16.gmra.mxu0 %v107
    %v143 = vpop.f32.mrf.mxu0
    %v144 = vadd.f32 %v92, %v143
    %v145 = vpop.f32.mrf.mxu0
    %v146 = vpop.f32.mrf.mxu0
    %v147 = vadd.f32 %v92, %v146
    %v148 = vpop.f32.mrf.mxu0
    %149 = vdwg.mxu0
    %v150 = vmul.f32 %v144, 0.5
    %v151 = vmul.f32 %v147, 0.5
    %v152 = vmul.f32 %v144, 0.70710677
    %v153 = vmul.f32 %v147, 0.70710677
    %v154 = verf.f32.pop %v152
    %v155 = verf.f32.pop %v153
    %v156 = vadd.f32 %v154, 1.0
    %v157 = vadd.f32 %v155, 1.0
    %v158 = vmul.f32 %v150, %v156
    %v159 = vmul.f32 %v151, %v157
    %v160 = vpack.c.bf16 %v159, %v158
    %v161 = vld [vmem:[%s5] sm:$0xf]
    %v162 = vld [vmem:[%s5 + $0x4] sm:$0xf]
    %v163 = vld [vmem:[%s5 + $0x8] sm:$0xf]
    %v164 = vld [vmem:[%s5 + $0xc] sm:$0xf]
    %v165 = vld [vmem:[%s5 + $0x10] sm:$0xf]
    %v166 = vld [vmem:[%s5 + $0x14] sm:$0xf]
    %v167 = vld [vmem:[%s5 + $0x18] sm:$0xf]
    %v168 = vld [vmem:[%s5 + $0x1c] sm:$0xf]
    %v169 = vld [vmem:[%s5 + $0x20] sm:$0xf]
    %v170 = vld [vmem:[%s5 + $0x24] sm:$0xf]
    %v171 = vld [vmem:[%s5 + $0x28] sm:$0xf]
    %v172 = vld [vmem:[%s5 + $0x2c] sm:$0xf]
    %v173 = vld [vmem:[%s5 + $0x30] sm:$0xf]
    %v174 = vld [vmem:[%s5 + $0x34] sm:$0xf]
    %v175 = vld [vmem:[%s5 + $0x38] sm:$0xf]
    %v176 = vld [vmem:[%s5 + $0x3c] sm:$0xf]
    %v177 = vld [vmem:[%s6] sm:$0x1]
    %v179 = vlaneseq
    %v180 = vshrl.u32 %v179, 7
    %v181 = vsub.s32 0, %v180
    %v182 = vrot.slane %v177, %v181
    %v200 = vunpack.c.l.b16 %v161
    %v201 = vunpack.c.l.b16 %v162
    %v202 = vunpack.c.l.b16 %v163
    %v203 = vunpack.c.l.b16 %v164
    %v204 = vunpack.c.l.b16 %v165
    %v205 = vunpack.c.l.b16 %v166
    %v206 = vunpack.c.l.b16 %v167
    %v207 = vunpack.c.l.b16 %v168
    %v208 = vunpack.c.l.b16 %v169
    %v209 = vunpack.c.l.b16 %v170
    %v210 = vunpack.c.l.b16 %v171
    %v211 = vunpack.c.l.b16 %v172
    %v212 = vunpack.c.l.b16 %v173
    %v213 = vunpack.c.l.b16 %v174
    %v214 = vunpack.c.l.b16 %v175
    %v215 = vunpack.c.l.b16 %v176
    %v216 = vpack.c.b16 %v201, %v200
    %v217 = vpack.c.b16 %v203, %v202
    %v218 = vpack.c.b16 %v205, %v204
    %v219 = vpack.c.b16 %v207, %v206
    %v220 = vpack.c.b16 %v209, %v208
    %v221 = vpack.c.b16 %v211, %v210
    %v222 = vpack.c.b16 %v213, %v212
    %v223 = vpack.c.b16 %v215, %v214
    %232 = vmatprep.subr.bf16.mxu0 0
    %233 = vmatpush1.bf16.msra.mxu0 %v223
    %234 = vmatprep.subr.bf16.mxu0 0
    %235 = vmatpush1.bf16.msra.mxu0 %v222
    %236 = vmatprep.subr.bf16.mxu0 0
    %237 = vmatpush1.bf16.msra.mxu0 %v221
    %238 = vmatprep.subr.bf16.mxu0 0
    %239 = vmatpush1.bf16.msra.mxu0 %v220
    %240 = vmatprep.subr.bf16.mxu0 0
    %241 = vmatpush1.bf16.msra.mxu0 %v219
    %242 = vmatprep.subr.bf16.mxu0 0
    %243 = vmatpush1.bf16.msra.mxu0 %v218
    %244 = vmatprep.subr.bf16.mxu0 0
    %245 = vmatpush1.bf16.msra.mxu0 %v217
    %246 = vmatprep.subr.bf16.mxu0 0
    %247 = vmatpush1.bf16.msra.mxu0 %v216
    %248 = vmatprep.subr.bf16.mxu0 0
    %249 = vmatpush2.bf16.msra.mxu0 0
    %250 = vmatprep.subr.bf16.mxu0 0
    %251 = vmatpush2.bf16.msra.mxu0 0
    %252 = vmatprep.subr.bf16.mxu0 0
    %253 = vmatpush2.bf16.msra.mxu0 0
    %254 = vmatprep.subr.bf16.mxu0 0
    %255 = vmatpush2.bf16.msra.mxu0 0
    %256 = vmatprep.subr.bf16.mxu0 0
    %257 = vmatpush2.bf16.msra.mxu0 0
    %258 = vmatprep.subr.bf16.mxu0 0
    %259 = vmatpush2.bf16.msra.mxu0 0
    %260 = vmatprep.subr.bf16.mxu0 0
    %261 = vmatpush2.bf16.msra.mxu0 0
    %262 = vmatprep.subr.bf16.mxu0 0
    %263 = vmatpush2.bf16.msra.mxu0 0
    %264 = vmatprep.mubr.bf16.mxu0 0
    %265 = vmatmul.mubr.bf16.gmra.mxu0 %v160
    %v266 = vpop.f32.mrf.mxu0
    %v267 = vadd.f32 %v182, %v266
    %v268 = vpop.f32.mrf.mxu0
    %v269 = vpop.f32.mrf.mxu0
    %v270 = vadd.f32 %v182, %v269
    %v271 = vpop.f32.mrf.mxu0
    %272 = vdwg.mxu0
    %v273 = vadd.f32 %v34, %v267
    %v274 = vadd.f32 %v35, %v270
    %v275 = vld [vmem:[%s7] sm:$0x1]
    %v276 = vld [vmem:[%s8] sm:$0x1]
    %v277 = vsel %vm38, %v273, 0.0
    %278 = vadd.xlane.f32.xlu0 %v277
    %v279 = vpop.xlane.xlu0 %278
    %v280 = vsel %vm38, %v274, 0.0
    %281 = vadd.xlane.f32.xlu0 %v280
    %v282 = vpop.xlane.xlu0 %281
    %v283 = vmul.f32 %v279, %v45
    %v284 = vmul.f32 %v282, %v45
    %v285 = vsub.f32 %v273, %v283
    %v286 = vsub.f32 %v274, %v284
    %v287 = vmul.f32 %v285, %v285
    %v288 = vmul.f32 %v286, %v286
    %v289 = vsel %vm38, %v287, 0.0
    %290 = vadd.xlane.f32.xlu0 %v289
    %v291 = vpop.xlane.xlu0 %290
    %v292 = vsel %vm38, %v288, 0.0
    %293 = vadd.xlane.f32.xlu0 %v292
    %v294 = vpop.xlane.xlu0 %293
    %v295 = vmul.f32 %v291, %v45
    %v296 = vmul.f32 %v294, %v45
    %v297 = vadd.f32 %v295, 1e-05
    %v298 = vadd.f32 %v296, 1e-05
    %v299 = vrsqrt.pop %v297
    %v300 = vrsqrt.pop %v298
    %v301 = vmul.f32 %v285, %v299
    %v302 = vmul.f32 %v286, %v300
    %v304 = vlaneseq
    %v305 = vshrl.u32 %v304, 7
    %v306 = vsub.s32 0, %v305
    %v307 = vrot.slane %v275, %v306
    %v309 = vmul.f32 %v301, %v307
    %v310 = vmul.f32 %v302, %v307
    %v312 = vlaneseq
    %v313 = vshrl.u32 %v312, 7
    %v314 = vsub.s32 0, %v313
    %v315 = vrot.slane %v276, %v314
    %v317 = vadd.f32 %v309, %v315
    %v318 = vadd.f32 %v310, %v315
    %v319 = vpack.c.bf16 %v318, %v317
    %v321 = vunpack.c.l.b16 %v319
    %v322 = vunpack.c.h.b16 %v319
    %v323 = vpack.c.b16 %v321, %v321
    %v324 = vpack.c.b16 %v322, %v322
    %vm327 = vcmask 257024
    %328 = vst.msk [vmem:[#allocation2] sm:$0xf] %vm327, %v323
    %329 = vst.msk [vmem:[#allocation2 + $0x4] sm:$0xf] %vm327, %v324
    // Predicated region
    $region38: #{tpu_custom_call.1} parent=1 // pred_check
      _
    $region39: #{tpu_custom_call.1} parent=1 // pred_check_branch
      %331 = sbr.rel (0) target = $region41
    $region40: #{tpu_custom_call.1} parent=1 // pred_region
      %s333 = ssub.s32 128, 128
      %334 = vsyncadd [#allocation3], %s333
      %s335 = sshll.u32 [#allocation2], 4
      %s336 = int_to_ptr.vmem [resolvable:$true] %s335
      %341 = dma.vmem_to_hbm [thread:$0]  %s336, 128, %s9, [#allocation3], 64, 64, 4
    $region41: #{tpu_custom_call.1} parent=1 // pred_fallthru
      _
    // Predicated region
    $region42: #{tpu_custom_call.1} parent=1 // pred_check
      _
    $region43: #{tpu_custom_call.1} parent=1 // pred_check_branch
      %343 = sbr.rel (0) target = $region45
    $region44: #{tpu_custom_call.1} parent=1 // pred_region
      %344 = dma.done [#allocation3], 128
    $region45: #{tpu_custom_call.1} parent=1 // pred_fallthru
      _
    %345 = vsyncpa [#allocation3], 1

</llo_original>
